<compile_context>
chip_gen: v6e
topology: v6e:2x2x1
jax: 0.10.0
libtpu: 0.0.40
codegen_flags: <defaults>
</compile_context>

<pallas_src>
import math

import numpy as np
import jax
import jax.numpy as jnp
from jax.experimental import pallas as pl
from jax.experimental.pallas import tpu as pltpu


def _gaussian_taps_1d(kernel_size: int, sigma: float) -> np.ndarray:
    """1D taps whose outer product equals the module's normalized 2D filter."""
    coords = np.arange(kernel_size, dtype=np.float64)
    mean = (kernel_size - 1) / 2.0
    g = np.exp(-((coords - mean) ** 2) / (2.0 * sigma ** 2))
    return g / g.sum()


def _band_matrix(n_out: int, n_in: int, taps: np.ndarray, padding: int) -> np.ndarray:
    """Clipped banded-Toeplitz matrix: M[i, h] = taps[h - i + padding].

    Zero padding of the convolution is folded in by simply clipping the band,
    so no padded scratch / border zeroing is needed anywhere.
    """
    K = len(taps)
    M = np.zeros((n_out, n_in), dtype=np.float64)
    for i in range(n_out):
        for k in range(K):
            h = i + k - padding
            if 0 <= h < n_in:
                M[i, h] = taps[k]
    return M


def _vmem_limit_bytes() -> int:
    """Generation-aware VMEM limit: ~3/4 of physical, capped at 96 MiB.

    -> ~48 MiB on v7x (64 MiB VMEM), 96 MiB on v5e/v6e (128 MiB VMEM)."""
    cap = 64 << 20
    try:
        cap = int(getattr(pltpu.get_tpu_info(), "vmem_capacity_bytes", cap))
    except Exception:
        pass
    return max(32 << 20, min(3 * cap // 4, 96 << 20))


def _pick_channel_block(nc: int, max_rows: int) -> int:
    """Channel chunk for the direct path: divides nc, is a multiple of 8
    (sublane rule for a 2D block) or equals nc, fits `max_rows`, and prefers
    splitting into >=2 grid steps when possible (pipelining + v7x megacore)."""
    legal = [d for d in range(1, nc + 1) if nc % d == 0 and (d % 8 == 0 or d == nc)]
    fit = [d for d in legal if d <= max_rows]
    if not fit:
        # Only reachable for tiny, indivisible nc; guarded by vmem_limit_bytes.
        return min(legal)
    split = [d for d in fit if d < nc]
    if split:
        return max(split)       # >= 2 grid steps
    return max(fit)


def _direct_blur_kernel(x_ref, b_ref, o_ref):
    # (cb, H*W) @ (H*W, Ho*Wo) -> (cb, Ho*Wo); padding baked into b.
    # Lane-dense load/store; single MXU matmul with f32 accumulation.
    o_ref[...] = jnp.dot(
        x_ref[...], b_ref[...], preferred_element_type=jnp.float32
    ).astype(o_ref.dtype)


def _separable_blur_kernel(x_ref, tw_ref, th_ref, o_ref):
    # Per channel: out = Th @ (X @ Tw). Both separable passes are MXU matmuls
    # against clipped Toeplitz bands; no padded scratch, no unaligned slices.
    t = jnp.dot(x_ref[...], tw_ref[...], preferred_element_type=jnp.float32)  # (H, Wo)
    t = t.astype(tw_ref.dtype)          # keep bf16 operands on bf16 inputs
    o_ref[...] = jnp.dot(
        th_ref[...], t, preferred_element_type=jnp.float32
    ).astype(o_ref.dtype)


def gaussian_blur(x, kernel_size=11, padding=5, sigma=1.6, max_direct_bytes=12 << 20):
    """Depthwise gaussian blur; semantics of F.conv2d(..., groups=C, bias=None)."""
    N, C, H, W = x.shape
    K, P = kernel_size, padding
    Ho = H + 2 * P - K + 1
    Wo = W + 2 * P - K + 1
    NC = N * C

    taps = _gaussian_taps_1d(K, sigma)
    th = _band_matrix(Ho, H, taps, P)        # (Ho, H): H-pass band (padding folded in)
    tw = _band_matrix(Wo, W, taps, P).T      # (W, Wo): W-pass band (padding folded in)

    wdt = jnp.bfloat16 if x.dtype == jnp.bfloat16 else jnp.float32
    witem = jnp.dtype(wdt).itemsize
    xitem = x.dtype.itemsize
    vmem_limit = _vmem_limit_bytes()

    direct_weight_bytes = H * W * Ho * Wo * witem
    if direct_weight_bytes <= max_direct_bytes:
        # ---- Small planes: whole blur as one lane-dense matmul per chunk ----
        HW, HoWo = H * W, Ho * Wo
        b_np = np.einsum("ih,wj->hwij", th, tw).reshape(HW, HoWo)  # B[hW+w, iWo+j]
        b = jnp.asarray(b_np, dtype=wdt)
        x2 = x.reshape(NC, HW)                       # free reshape (no HBM transpose)

        row_bytes = (HW + HoWo) * xitem              # per-channel in + out
        avail = max(vmem_limit - direct_weight_bytes - (4 << 20), 1 << 20)
        cb = _pick_channel_block(NC, max(8, avail // (2 * row_bytes)))  # 2x: dbl-buffer

        out2 = pl.pallas_call(
            _direct_blur_kernel,
            out_shape=jax.ShapeDtypeStruct((NC, HoWo), x.dtype),
            grid=(NC // cb,),
            in_specs=[
                pl.BlockSpec((cb, HW), lambda g: (g, 0)),
                pl.BlockSpec((HW, HoWo), lambda g: (0, 0)),   # weights stay resident
            ],
            out_specs=pl.BlockSpec((cb, HoWo), lambda g: (g, 0)),
            compiler_params=pltpu.CompilerParams(
                dimension_semantics=("parallel",),
                vmem_limit_bytes=vmem_limit,
            ),
        )(x2, b)
        return out2.reshape(N, C, Ho, Wo)            # free reshape back to NCHW

    # ---- Large planes: separable banded-Toeplitz MXU path, one channel/step ----
    # Selected when planes are big, so Wo >= ~128 and stores are lane-dense.
    # TODO(synk): add H/W spatial tiling with halo for planes too large for VMEM.
    x3 = x.reshape(NC, H, W)                         # free reshape (no HBM transpose)
    tw_j = jnp.asarray(tw, dtype=wdt)
    th_j = jnp.asarray(th, dtype=wdt)

    out3 = pl.pallas_call(
        _separable_blur_kernel,
        out_shape=jax.ShapeDtypeStruct((NC, Ho, Wo), x.dtype),
        grid=(NC,),
        in_specs=[
            pl.BlockSpec((None, H, W), lambda c: (c, 0, 0)),
            pl.BlockSpec((W, Wo), lambda c: (0, 0)),
            pl.BlockSpec((Ho, H), lambda c: (0, 0)),
        ],
        out_specs=pl.BlockSpec((None, Ho, Wo), lambda c: (c, 0, 0)),
        compiler_params=pltpu.CompilerParams(
            dimension_semantics=("parallel",),
            vmem_limit_bytes=vmem_limit,
        ),
    )(x3, tw_j, th_j)
    return out3.reshape(N, C, Ho, Wo)


def _reference(x, kernel_size=11, padding=5, sigma=1.6):
    """Pure-JAX depthwise conv reference using the module's exact 2D weights."""
    C = x.shape[1]
    K = kernel_size
    coords = np.arange(K, dtype=np.float64)
    xg = np.tile(coords[None, :], (K, 1))
    yg = xg.T
    mean = (K - 1) / 2.0
    var = sigma ** 2
    g = (1.0 / (2.0 * math.pi * var)) * np.exp(
        -((xg - mean) ** 2 + (yg - mean) ** 2) / (2.0 * var))
    g = (g / g.sum()).astype(np.float32)
    w = jnp.broadcast_to(jnp.asarray(g)[None, None], (C, 1, K, K))
    return jax.lax.conv_general_dilated(
        x, w, window_strides=(1, 1), padding=[(padding, padding)] * 2,
        dimension_numbers=("NCHW", "OIHW", "NCHW"), feature_group_count=C)


if __name__ == "__main__":
    key = jax.random.PRNGKey(0)
    N, C, H, W = 2, 4, 16, 16
    x = jax.random.normal(key, (N, C, H, W), dtype=jnp.float32)

    ref = _reference(x)

    # Default path for small planes: dense blur-matrix MXU kernel.
    out_direct = jax.block_until_ready(gaussian_blur(x))
    assert out_direct.shape == (N, C, H, W)
    err_d = float(jnp.max(jnp.abs(out_direct - ref)))
    assert jnp.allclose(out_direct, ref, atol=1e-4, rtol=1e-4), err_d

    # Force the large-plane separable banded-Toeplitz MXU path to validate it
    # too (same small input, same reference).
    out_sep = jax.block_until_ready(gaussian_blur(x, max_direct_bytes=0))
    assert out_sep.shape == (N, C, H, W)
    err_s = float(jnp.max(jnp.abs(out_sep - ref)))
    assert jnp.allclose(out_sep, ref, atol=1e-4, rtol=1e-4), err_s

    print("KERNEL_OK")
</pallas_src>

<mosaic_0001>
module attributes {stable_mosaic.version = 11 : i64} {
  func.func @_direct_blur_kernel(%arg0: i32, %arg1: memref<8x256xf32, #tpu.memory_space<vmem>>, %arg2: memref<256x256xf32, #tpu.memory_space<vmem>>, %arg3: memref<8x256xf32, #tpu.memory_space<vmem>>) attributes {dimension_semantics = [#tpu.dimension_semantics<parallel>], iteration_bounds = array<i64: 1>, scalar_prefetch = 0 : i64, scratch_operands = 0 : i64, tpu.core_type = #tpu.core_type<tc>, window_params = [{transform_indices = @transform_0, window_bounds = array<i64: 8, 256>}, {pipeline_mode = #tpu.pipeline_mode<synchronous>, transform_indices = @transform_1, window_bounds = array<i64: 256, 256>}, {transform_indices = @transform_2, window_bounds = array<i64: 8, 256>}]} {
    %c0 = arith.constant 0 : index
    %c0_0 = arith.constant 0 : index
    %0 = vector.load %arg1[%c0, %c0_0] : memref<8x256xf32, #tpu.memory_space<vmem>>, vector<8x256xf32>
    %c0_1 = arith.constant 0 : index
    %c0_2 = arith.constant 0 : index
    %1 = vector.load %arg2[%c0_1, %c0_2] : memref<256x256xf32, #tpu.memory_space<vmem>>, vector<256x256xf32>
    %cst = arith.constant dense<0.000000e+00> : vector<8x256xf32>
    %2 = tpu.matmul %0, %1, %cst {dimension_numbers = #tpu.dot_dimension_numbers<[1], [0], [0], [1], [0, 0, 1, 1], [], []>} : vector<8x256xf32>, vector<256x256xf32>, vector<8x256xf32> -> vector<8x256xf32>
    %c0_3 = arith.constant 0 : index
    %c0_4 = arith.constant 0 : index
    %3 = vector.load %arg3[%c0_3, %c0_4] : memref<8x256xf32, #tpu.memory_space<vmem>>, vector<8x256xf32>
    tpu.vector_store %arg3[%c0_3, %c0_4], %2 {strides = array<i32>} : memref<8x256xf32, #tpu.memory_space<vmem>>, vector<8x256xf32>,
    return
  }
  func.func @transform_0(%arg0: i32) -> (i32, i32) {
    %c0_i32 = arith.constant 0 : i32
    %c0_i32_0 = arith.constant 0 : i32
    return %arg0, %c0_i32 : i32, i32
  }
  func.func @transform_1(%arg0: i32) -> (i32, i32) {
    %c0_i32 = arith.constant 0 : i32
    %c0_i32_0 = arith.constant 0 : i32
    %c0_i32_1 = arith.constant 0 : i32
    return %c0_i32, %c0_i32_0 : i32, i32
  }
  func.func @transform_2(%arg0: i32) -> (i32, i32) {
    %c0_i32 = arith.constant 0 : i32
    %c0_i32_0 = arith.constant 0 : i32
    return %arg0, %c0_i32 : i32, i32
  }
}

</mosaic_0001>

<llo_original>
// kernel: tpu_custom_call.1
$region0: #{tpu_custom_call.1}
  #allocation0 [shape = 'u32[]', space=smem, size = 0x4, offset = 0x4, fixed_abs, tag = 'smem constant byte address 0x4 - core index']
  #allocation1 [shape = 'u32[144,128]{1,0:T(1,128)}', space=vmem, size = 0x12000, scoped, tag = 'internal scratch']
  %s0 = inlined_call_operand.hbm [shape: f32[8,256], index: 0, kind: input, shape index: {}]
  %s1 = inlined_call_operand.hbm [shape: f32[256,256], index: 1, kind: input, shape index: {}]
  %s2 = inlined_call_operand.hbm [shape: f32[8,256], index: 2, kind: output, shape index: {}]
  %s3 = sld [smem:[#allocation0]]
  $region26: #{tpu_custom_call.1} parent=0
    _
  %s5 = ssub.s32 1, %s3
  %s6 = scalar_select 0, %s5, %s3
  $region1: #{tpu_custom_call.1} parent=0
    #allocation2 [shape = 'u8[8192]{0}', space=vmem, size = 0x2000, scoped, tag = 'input window, operand 0, single buffered']
    #allocation3 [shape = 's32[1]{0}', space=sflag, size = 0x4, scoped, tag = 'scoped memory for tpu_custom_call.1']
    #allocation4 [shape = 's32[1]{0}', space=sflag, size = 0x4, scoped, tag = 'scoped memory for tpu_custom_call.1']
    #allocation5 [shape = 'u8[262144]{0}', space=vmem, size = 0x40000, scoped, tag = 'input window, operand 1, single buffered']
    #allocation6 [shape = 's32[1]{0}', space=sflag, size = 0x4, scoped, tag = 'scoped memory for tpu_custom_call.1']
    #allocation7 [shape = 'u8[8192]{0}', space=vmem, size = 0x2000, scoped, tag = 'output window, operand 0, single buffered']
    %7 = vsyncpa [#allocation3], 0
    %8 = vsyncpa [#allocation6], 0
    %9 = vsyncpa [#allocation4], 0
    // Predicated region
    $region2: #{tpu_custom_call.1} parent=1 // pred_check
      _
    $region3: #{tpu_custom_call.1} parent=1 // pred_check_branch
      %11 = sbr.rel (0) target = $region5
    $region4: #{tpu_custom_call.1} parent=1 // pred_region
      %s13 = ssub.s32 256, 256
      %14 = vsyncadd [#allocation3], %s13
      %s16 = sshll.u32 [#allocation2], 4
      %s17 = int_to_ptr.vmem [resolvable:$true] %s16
      %19 = dma.hbm_to_vmem [thread:$0]  %s0, 256, %s17, [#allocation3]
    $region5: #{tpu_custom_call.1} parent=1 // pred_fallthru
      _
    // Predicated region
    $region6: #{tpu_custom_call.1} parent=1 // pred_check
      _
    $region7: #{tpu_custom_call.1} parent=1 // pred_check_branch
      %21 = sbr.rel (0) target = $region9
    $region8: #{tpu_custom_call.1} parent=1 // pred_region
      %s23 = ssub.s32 8192, 8192
      %24 = vsyncadd [#allocation6], %s23
      %s25 = sshll.u32 [#allocation5], 4
      %s26 = int_to_ptr.vmem [resolvable:$true] %s25
      %31 = dma.hbm_to_vmem [thread:$0]  %s1, 8192, %s26, [#allocation6], 256, 256, 16
    $region9: #{tpu_custom_call.1} parent=1 // pred_fallthru
      _
    // Predicated region
    $region10: #{tpu_custom_call.1} parent=1 // pred_check
      _
    $region11: #{tpu_custom_call.1} parent=1 // pred_check_branch
      %33 = sbr.rel (0) target = $region13
    $region12: #{tpu_custom_call.1} parent=1 // pred_region
      %34 = dma.done [#allocation3], 256
    $region13: #{tpu_custom_call.1} parent=1 // pred_fallthru
      _
    // Predicated region
    $region14: #{tpu_custom_call.1} parent=1 // pred_check
      _
    $region15: #{tpu_custom_call.1} parent=1 // pred_check_branch
      %36 = sbr.rel (0) target = $region17
    $region16: #{tpu_custom_call.1} parent=1 // pred_region
      %37 = dma.done [#allocation6], 8192
    $region17: #{tpu_custom_call.1} parent=1 // pred_fallthru
      _
    %v38 = vld [vmem:[#allocation2] sm:$0xff]
    %v39 = vld [vmem:[#allocation2 + $0x8] sm:$0xff]
    %v40 = vld [vmem:[#allocation5] sm:$0xff]
    %v41 = vld [vmem:[#allocation5 + $0x8] sm:$0xff]
    %v42 = vld [vmem:[#allocation5 + $0x10] sm:$0xff]
    %v43 = vld [vmem:[#allocation5 + $0x18] sm:$0xff]
    %v44 = vld [vmem:[#allocation5 + $0x20] sm:$0xff]
    %v45 = vld [vmem:[#allocation5 + $0x28] sm:$0xff]
    %v46 = vld [vmem:[#allocation5 + $0x30] sm:$0xff]
    %v47 = vld [vmem:[#allocation5 + $0x38] sm:$0xff]
    %v48 = vld [vmem:[#allocation5 + $0x40] sm:$0xff]
    %v49 = vld [vmem:[#allocation5 + $0x48] sm:$0xff]
    %v50 = vld [vmem:[#allocation5 + $0x50] sm:$0xff]
    %v51 = vld [vmem:[#allocation5 + $0x58] sm:$0xff]
    %v52 = vld [vmem:[#allocation5 + $0x60] sm:$0xff]
    %v53 = vld [vmem:[#allocation5 + $0x68] sm:$0xff]
    %v54 = vld [vmem:[#allocation5 + $0x70] sm:$0xff]
    %v55 = vld [vmem:[#allocation5 + $0x78] sm:$0xff]
    %v56 = vld [vmem:[#allocation5 + $0x80] sm:$0xff]
    %v57 = vld [vmem:[#allocation5 + $0x88] sm:$0xff]
    %v58 = vld [vmem:[#allocation5 + $0x90] sm:$0xff]
    %v59 = vld [vmem:[#allocation5 + $0x98] sm:$0xff]
    %v60 = vld [vmem:[#allocation5 + $0xa0] sm:$0xff]
    %v61 = vld [vmem:[#allocation5 + $0xa8] sm:$0xff]
    %v62 = vld [vmem:[#allocation5 + $0xb0] sm:$0xff]
    %v63 = vld [vmem:[#allocation5 + $0xb8] sm:$0xff]
    %v64 = vld [vmem:[#allocation5 + $0xc0] sm:$0xff]
    %v65 = vld [vmem:[#allocation5 + $0xc8] sm:$0xff]
    %v66 = vld [vmem:[#allocation5 + $0xd0] sm:$0xff]
    %v67 = vld [vmem:[#allocation5 + $0xd8] sm:$0xff]
    %v68 = vld [vmem:[#allocation5 + $0xe0] sm:$0xff]
    %v69 = vld [vmem:[#allocation5 + $0xe8] sm:$0xff]
    %v70 = vld [vmem:[#allocation5 + $0xf0] sm:$0xff]
    %v71 = vld [vmem:[#allocation5 + $0xf8] sm:$0xff]
    %v72 = vld [vmem:[#allocation5 + $0x100] sm:$0xff]
    %v73 = vld [vmem:[#allocation5 + $0x108] sm:$0xff]
    %v74 = vld [vmem:[#allocation5 + $0x110] sm:$0xff]
    %v75 = vld [vmem:[#allocation5 + $0x118] sm:$0xff]
    %v76 = vld [vmem:[#allocation5 + $0x120] sm:$0xff]
    %v77 = vld [vmem:[#allocation5 + $0x128] sm:$0xff]
    %v78 = vld [vmem:[#allocation5 + $0x130] sm:$0xff]
    %v79 = vld [vmem:[#allocation5 + $0x138] sm:$0xff]
    %v80 = vld [vmem:[#allocation5 + $0x140] sm:$0xff]
    %v81 = vld [vmem:[#allocation5 + $0x148] sm:$0xff]
    %v82 = vld [vmem:[#allocation5 + $0x150] sm:$0xff]
    %v83 = vld [vmem:[#allocation5 + $0x158] sm:$0xff]
    %v84 = vld [vmem:[#allocation5 + $0x160] sm:$0xff]
    %v85 = vld [vmem:[#allocation5 + $0x168] sm:$0xff]
    %v86 = vld [vmem:[#allocation5 + $0x170] sm:$0xff]
    %v87 = vld [vmem:[#allocation5 + $0x178] sm:$0xff]
    %v88 = vld [vmem:[#allocation5 + $0x180] sm:$0xff]
    %v89 = vld [vmem:[#allocation5 + $0x188] sm:$0xff]
    %v90 = vld [vmem:[#allocation5 + $0x190] sm:$0xff]
    %v91 = vld [vmem:[#allocation5 + $0x198] sm:$0xff]
    %v92 = vld [vmem:[#allocation5 + $0x1a0] sm:$0xff]
    %v93 = vld [vmem:[#allocation5 + $0x1a8] sm:$0xff]
    %v94 = vld [vmem:[#allocation5 + $0x1b0] sm:$0xff]
    %v95 = vld [vmem:[#allocation5 + $0x1b8] sm:$0xff]
    %v96 = vld [vmem:[#allocation5 + $0x1c0] sm:$0xff]
    %v97 = vld [vmem:[#allocation5 + $0x1c8] sm:$0xff]
    %v98 = vld [vmem:[#allocation5 + $0x1d0] sm:$0xff]
    %v99 = vld [vmem:[#allocation5 + $0x1d8] sm:$0xff]
    %v100 = vld [vmem:[#allocation5 + $0x1e0] sm:$0xff]
    %v101 = vld [vmem:[#allocation5 + $0x1e8] sm:$0xff]
    %v102 = vld [vmem:[#allocation5 + $0x1f0] sm:$0xff]
    %v103 = vld [vmem:[#allocation5 + $0x1f8] sm:$0xff]
    %104 = vmatprep.subr.mxu0 %v71
    %105 = vmatpush1.msra.mxu0 %v70
    %106 = vmatprep.subr.mxu0 %v69
    %107 = vmatpush1.msra.mxu0 %v68
    %108 = vmatprep.subr.mxu0 %v67
    %109 = vmatpush1.msra.mxu0 %v66
    %110 = vmatprep.subr.mxu0 %v65
    %111 = vmatpush1.msra.mxu0 %v64
    %112 = vmatprep.subr.mxu0 %v63
    %113 = vmatpush1.msra.mxu0 %v62
    %114 = vmatprep.subr.mxu0 %v61
    %115 = vmatpush1.msra.mxu0 %v60
    %116 = vmatprep.subr.mxu0 %v59
    %117 = vmatpush1.msra.mxu0 %v58
    %118 = vmatprep.subr.mxu0 %v57
    %119 = vmatpush1.msra.mxu0 %v56
    %120 = vmatprep.subr.mxu0 %v55
    %121 = vmatpush1.msra.mxu0 %v54
    %122 = vmatprep.subr.mxu0 %v53
    %123 = vmatpush1.msra.mxu0 %v52
    %124 = vmatprep.subr.mxu0 %v51
    %125 = vmatpush1.msra.mxu0 %v50
    %126 = vmatprep.subr.mxu0 %v49
    %127 = vmatpush1.msra.mxu0 %v48
    %128 = vmatprep.subr.mxu0 %v47
    %129 = vmatpush1.msra.mxu0 %v46
    %130 = vmatprep.subr.mxu0 %v45
    %131 = vmatpush1.msra.mxu0 %v44
    %132 = vmatprep.subr.mxu0 %v43
    %133 = vmatpush1.msra.mxu0 %v42
    %134 = vmatprep.subr.mxu0 %v41
    %135 = vmatpush1.msra.mxu0 %v40
    %136 = vmatprep.subr.mxu0 %v103
    %137 = vmatpush2.msra.mxu0 %v102
    %138 = vmatprep.subr.mxu0 %v101
    %139 = vmatpush2.msra.mxu0 %v100
    %140 = vmatprep.subr.mxu0 %v99
    %141 = vmatpush2.msra.mxu0 %v98
    %142 = vmatprep.subr.mxu0 %v97
    %143 = vmatpush2.msra.mxu0 %v96
    %144 = vmatprep.subr.mxu0 %v95
    %145 = vmatpush2.msra.mxu0 %v94
    %146 = vmatprep.subr.mxu0 %v93
    %147 = vmatpush2.msra.mxu0 %v92
    %148 = vmatprep.subr.mxu0 %v91
    %149 = vmatpush2.msra.mxu0 %v90
    %150 = vmatprep.subr.mxu0 %v89
    %151 = vmatpush2.msra.mxu0 %v88
    %152 = vmatprep.subr.mxu0 %v87
    %153 = vmatpush2.msra.mxu0 %v86
    %154 = vmatprep.subr.mxu0 %v85
    %155 = vmatpush2.msra.mxu0 %v84
    %156 = vmatprep.subr.mxu0 %v83
    %157 = vmatpush2.msra.mxu0 %v82
    %158 = vmatprep.subr.mxu0 %v81
    %159 = vmatpush2.msra.mxu0 %v80
    %160 = vmatprep.subr.mxu0 %v79
    %161 = vmatpush2.msra.mxu0 %v78
    %162 = vmatprep.subr.mxu0 %v77
    %163 = vmatpush2.msra.mxu0 %v76
    %164 = vmatprep.subr.mxu0 %v75
    %165 = vmatpush2.msra.mxu0 %v74
    %166 = vmatprep.subr.mxu0 %v73
    %167 = vmatpush2.msra.mxu0 %v72
    %168 = vmatprep.mubr.f32.mxu0 %v39
    %169 = vmatmul.mubr.f32.gmra.mxu0 %v38
    %v170 = vpop.f32.mrf.mxu0
    %v171 = vadd.f32 0.0, %v170
    %v172 = vpop.f32.mrf.mxu0
    %v173 = vadd.f32 0.0, %v172
    %174 = vdwg.mxu0
    %175 = vst [vmem:[#allocation7] sm:$0xff] %v171
    %176 = vst [vmem:[#allocation7 + $0x8] sm:$0xff] %v173
    // Predicated region
    $region18: #{tpu_custom_call.1} parent=1 // pred_check
      _
    $region19: #{tpu_custom_call.1} parent=1 // pred_check_branch
      %178 = sbr.rel (0) target = $region21
    $region20: #{tpu_custom_call.1} parent=1 // pred_region
      %s180 = ssub.s32 256, 256
      %181 = vsyncadd [#allocation4], %s180
      %s183 = sshll.u32 [#allocation7], 4
      %s184 = int_to_ptr.vmem [resolvable:$true] %s183
      %186 = dma.vmem_to_hbm [thread:$0]  %s184, 256, %s2, [#allocation4]
    $region21: #{tpu_custom_call.1} parent=1 // pred_fallthru
      _
    // Predicated region
    $region22: #{tpu_custom_call.1} parent=1 // pred_check
      _
    $region23: #{tpu_custom_call.1} parent=1 // pred_check_branch
      %188 = sbr.rel (0) target = $region25
    $region24: #{tpu_custom_call.1} parent=1 // pred_region
      %189 = dma.done [#allocation4], 256
    $region25: #{tpu_custom_call.1} parent=1 // pred_fallthru
      _
    %190 = vsyncpa [#allocation3], 1
    %191 = vsyncpa [#allocation6], 1
    %192 = vsyncpa [#allocation4], 1

</llo_original>
